<compile_context>
chip_gen: v7x
topology: tpu7x:2x2x1
jax: 0.10.0
libtpu: 0.0.40
codegen_flags: <defaults>
</compile_context>

<pallas_src>
import jax
import jax.numpy as jnp
from jax.experimental import pallas as pl
from jax.experimental.pallas import tpu as pltpu


def lstm_kernel(x_ref, embproj_ref, whh_ref, fcw_ref, fcb_ref, out_ref):
    # x_ref      : (B, 4*L) f32  channel-major flattened scores, x[b, c*L + l]
    # embproj_ref: (4, 4W)  f32  emb_table @ W_ih^T + (b_ih + b_hh)   (bias folded)
    # whh_ref    : (W, 4W)  f32  W_hh^T
    # fcw_ref    : (1, W)   f32  fc weight row
    # fcb_ref    : (1, 1)   f32  fc bias
    # out_ref    : (B, 1)   f32
    B = x_ref.shape[0]
    L = x_ref.shape[1] // 4
    W = whh_ref.shape[0]

    x = x_ref[...]                            # (B, 4L)
    c0 = x[:, 0 * L:1 * L]
    c1 = x[:, 1 * L:2 * L]
    c2 = x[:, 2 * L:3 * L]
    c3 = x[:, 3 * L:4 * L]                    # each (B, L)
    mx = jnp.maximum(jnp.maximum(c0, c1), jnp.maximum(c2, c3))

    # First-occurrence argmax as float one-hot weights (matches torch/jnp tie-break).
    w0 = jnp.where(c0 == mx, 1.0, 0.0)
    w1 = jnp.where(c1 == mx, 1.0, 0.0) * (1.0 - w0)
    w2 = jnp.where(c2 == mx, 1.0, 0.0) * (1.0 - w0) * (1.0 - w1)
    w3 = 1.0 - w0 - w1 - w2                   # each (B, L), values in {0, 1}

    embproj = embproj_ref[...]                # (4, 4W)
    row0 = embproj[0:1, :]
    row1 = embproj[1:2, :]
    row2 = embproj[2:3, :]
    row3 = embproj[3:4, :]
    whh = whh_ref[...]                        # (W, 4W)

    # Hoisted input path: per-timestep gate pre-activation contribution
    # (= x_t @ W_ih^T + b_ih + b_hh), realised as a 4-way VPU select.
    xs = []
    for t in range(L):
        xs.append(w0[:, t:t + 1] * row0 + w1[:, t:t + 1] * row1
                  + w2[:, t:t + 1] * row2 + w3[:, t:t + 1] * row3)   # (B, 4W)

    h = jnp.zeros((B, W), jnp.float32)
    c = jnp.zeros((B, W), jnp.float32)

    # Fully-unrolled recurrence (T = L is a static compile-time constant).
    for t in range(L):
        if t == 0:
            gates = xs[0]                     # h0 == 0  ->  skip h @ W_hh
        else:
            gates = xs[t] + jnp.dot(h, whh, preferred_element_type=jnp.float32)
        sig = jax.nn.sigmoid(gates)           # one full-width (B, 4W) EUP pass
        i_g = sig[:, 0 * W:1 * W]
        f_g = sig[:, 1 * W:2 * W]
        o_g = sig[:, 3 * W:4 * W]
        g_g = jnp.tanh(gates[:, 2 * W:3 * W])
        c = f_g * c + i_g * g_g
        h = o_g * jnp.tanh(c)

    # Final Linear(W -> 1): VPU multiply + lane reduction (avoid an N=1 MXU matmul).
    out_ref[...] = (jnp.sum(h * fcw_ref[...], axis=-1, keepdims=True)
                    + fcb_ref[...])


def prepare_params(params):
    """One-time (init-time) weight preprocessing; do NOT call per forward pass."""
    emb = params["embedding"].astype(jnp.float32)          # (4, E)
    w_ih = params["w_ih"].astype(jnp.float32)              # (4W, E)
    w_hh = params["w_hh"].astype(jnp.float32)              # (4W, W)
    bias = (params["b_ih"] + params["b_hh"]).astype(jnp.float32)   # (4W,)
    W = w_hh.shape[1]
    embproj = emb @ w_ih.T + bias[None, :]                 # (4, 4W), bias folded in
    return {
        "embproj": embproj,                                # (4, 4W)
        "whh_t": w_hh.T,                                   # (W, 4W)
        "fc_w": params["fc_w"].reshape(1, W).astype(jnp.float32),
        "fc_b": params["fc_b"].reshape(1, 1).astype(jnp.float32),
    }


@jax.jit
def simple_lstm_forward(x, prepared):
    """x: (B, 4, L) float scores, PyTorch NCL layout. Returns (B, 1)."""
    B, C, L = x.shape
    assert C == 4
    Bp = ((B + 7) // 8) * 8                                # pad batch to full f32 sublanes
    x2 = x.astype(jnp.float32).reshape(B, C * L)           # row-major -> free reshape
    if Bp != B:
        x2 = jnp.pad(x2, ((0, Bp - B), (0, 0)))            # padded rows are independent

    vmem = pltpu.MemorySpace.VMEM
    out = pl.pallas_call(
        lstm_kernel,
        out_shape=jax.ShapeDtypeStruct((Bp, 1), jnp.float32),
        in_specs=[pl.BlockSpec(memory_space=vmem)] * 5,
        out_specs=pl.BlockSpec(memory_space=vmem),
    )(x2, prepared["embproj"], prepared["whh_t"], prepared["fc_w"], prepared["fc_b"])
    return out[:B]


def init_params(key, embedding_size=16, width=32):
    ks = jax.random.split(key, 7)
    stdv = 1.0 / jnp.sqrt(width)
    return {
        "embedding": jax.random.normal(ks[0], (4, embedding_size), jnp.float32),
        "w_ih": jax.random.uniform(ks[1], (4 * width, embedding_size),
                                   jnp.float32, -stdv, stdv),
        "w_hh": jax.random.uniform(ks[2], (4 * width, width),
                                   jnp.float32, -stdv, stdv),
        "b_ih": jax.random.uniform(ks[3], (4 * width,), jnp.float32, -stdv, stdv),
        "b_hh": jax.random.uniform(ks[4], (4 * width,), jnp.float32, -stdv, stdv),
        "fc_w": jax.random.uniform(ks[5], (1, width), jnp.float32, -stdv, stdv),
        "fc_b": jax.random.uniform(ks[6], (1,), jnp.float32, -stdv, stdv),
    }


if __name__ == "__main__":
    key = jax.random.PRNGKey(0)
    k_x, k_p = jax.random.split(key)

    B, C, L = 2, 4, 8          # batch, nucleotide channels, sequence length
    E, W = 16, 32              # embedding size, LSTM hidden width (small)

    # Synthetic one-hot-like input scores, PyTorch NCL layout (B, 4, L).
    x = jax.random.normal(k_x, (B, C, L), jnp.float32)

    params = init_params(k_p, embedding_size=E, width=W)
    prepared = prepare_params(params)      # init-time weight folding (no per-call glue)

    out = simple_lstm_forward(x, prepared)
    out = jax.block_until_ready(out)
    assert out.shape == (B, 1), out.shape
    print("KERNEL_OK")
</pallas_src>

<mosaic_0001>
module attributes {stable_mosaic.version = 11 : i64} {
  func.func @lstm_kernel(%arg0: memref<8x32xf32, #tpu.memory_space<vmem>>, %arg1: memref<4x128xf32, #tpu.memory_space<vmem>>, %arg2: memref<32x128xf32, #tpu.memory_space<vmem>>, %arg3: memref<1x32xf32, #tpu.memory_space<vmem>>, %arg4: memref<1x1xf32, #tpu.memory_space<vmem>>, %arg5: memref<8x1xf32, #tpu.memory_space<vmem>>) attributes {dimension_semantics = [], scalar_prefetch = 0 : i64, scratch_operands = 0 : i64, tpu.core_type = #tpu.core_type<tc>} {
    %c0 = arith.constant 0 : index
    %c0_0 = arith.constant 0 : index
    %0 = vector.load %arg0[%c0, %c0_0] : memref<8x32xf32, #tpu.memory_space<vmem>>, vector<8x32xf32>
    %1 = vector.extract_strided_slice %0 {offsets = [0, 0], sizes = [8, 8], strides = [1, 1]} : vector<8x32xf32> to vector<8x8xf32>
    %2 = vector.extract_strided_slice %0 {offsets = [0, 8], sizes = [8, 8], strides = [1, 1]} : vector<8x32xf32> to vector<8x8xf32>
    %3 = vector.extract_strided_slice %0 {offsets = [0, 16], sizes = [8, 8], strides = [1, 1]} : vector<8x32xf32> to vector<8x8xf32>
    %4 = vector.extract_strided_slice %0 {offsets = [0, 24], sizes = [8, 8], strides = [1, 1]} : vector<8x32xf32> to vector<8x8xf32>
    %5 = arith.maximumf %1, %2 : vector<8x8xf32>
    %6 = arith.maximumf %3, %4 : vector<8x8xf32>
    %7 = arith.maximumf %5, %6 : vector<8x8xf32>
    %8 = arith.cmpf oeq, %1, %7 : vector<8x8xf32>
    %cst = arith.constant 1.000000e+00 : f32
    %cst_1 = arith.constant 0.000000e+00 : f32
    %9 = vector.broadcast %cst : f32 to vector<8x8xf32>
    %10 = vector.broadcast %cst_1 : f32 to vector<8x8xf32>
    %11 = arith.select %8, %9, %10 : vector<8x8xi1>, vector<8x8xf32>
    %12 = arith.cmpf oeq, %2, %7 : vector<8x8xf32>
    %cst_2 = arith.constant 1.000000e+00 : f32
    %cst_3 = arith.constant 0.000000e+00 : f32
    %13 = vector.broadcast %cst_2 : f32 to vector<8x8xf32>
    %14 = vector.broadcast %cst_3 : f32 to vector<8x8xf32>
    %15 = arith.select %12, %13, %14 : vector<8x8xi1>, vector<8x8xf32>
    %cst_4 = arith.constant 1.000000e+00 : f32
    %16 = vector.broadcast %cst_4 : f32 to vector<8x8xf32>
    %17 = arith.subf %16, %11 : vector<8x8xf32>
    %18 = arith.mulf %15, %17 : vector<8x8xf32>
    %19 = arith.cmpf oeq, %3, %7 : vector<8x8xf32>
    %cst_5 = arith.constant 1.000000e+00 : f32
    %cst_6 = arith.constant 0.000000e+00 : f32
    %20 = vector.broadcast %cst_5 : f32 to vector<8x8xf32>
    %21 = vector.broadcast %cst_6 : f32 to vector<8x8xf32>
    %22 = arith.select %19, %20, %21 : vector<8x8xi1>, vector<8x8xf32>
    %cst_7 = arith.constant 1.000000e+00 : f32
    %23 = vector.broadcast %cst_7 : f32 to vector<8x8xf32>
    %24 = arith.subf %23, %11 : vector<8x8xf32>
    %25 = arith.mulf %22, %24 : vector<8x8xf32>
    %cst_8 = arith.constant 1.000000e+00 : f32
    %26 = vector.broadcast %cst_8 : f32 to vector<8x8xf32>
    %27 = arith.subf %26, %18 : vector<8x8xf32>
    %28 = arith.mulf %25, %27 : vector<8x8xf32>
    %cst_9 = arith.constant 1.000000e+00 : f32
    %29 = vector.broadcast %cst_9 : f32 to vector<8x8xf32>
    %30 = arith.subf %29, %11 : vector<8x8xf32>
    %31 = arith.subf %30, %18 : vector<8x8xf32>
    %32 = arith.subf %31, %28 : vector<8x8xf32>
    %c0_10 = arith.constant 0 : index
    %c0_11 = arith.constant 0 : index
    %33 = vector.load %arg1[%c0_10, %c0_11] : memref<4x128xf32, #tpu.memory_space<vmem>>, vector<4x128xf32>
    %34 = vector.extract_strided_slice %33 {offsets = [0, 0], sizes = [1, 128], strides = [1, 1]} : vector<4x128xf32> to vector<1x128xf32>
    %35 = vector.extract_strided_slice %33 {offsets = [1, 0], sizes = [1, 128], strides = [1, 1]} : vector<4x128xf32> to vector<1x128xf32>
    %36 = vector.extract_strided_slice %33 {offsets = [2, 0], sizes = [1, 128], strides = [1, 1]} : vector<4x128xf32> to vector<1x128xf32>
    %37 = vector.extract_strided_slice %33 {offsets = [3, 0], sizes = [1, 128], strides = [1, 1]} : vector<4x128xf32> to vector<1x128xf32>
    %c0_12 = arith.constant 0 : index
    %c0_13 = arith.constant 0 : index
    %38 = vector.load %arg2[%c0_12, %c0_13] : memref<32x128xf32, #tpu.memory_space<vmem>>, vector<32x128xf32>
    %39 = vector.extract_strided_slice %11 {offsets = [0, 0], sizes = [8, 1], strides = [1, 1]} : vector<8x8xf32> to vector<8x1xf32>
    %40 = vector.broadcast %39 : vector<8x1xf32> to vector<8x128xf32>
    %41 = vector.broadcast %34 : vector<1x128xf32> to vector<8x128xf32>
    %42 = arith.mulf %40, %41 : vector<8x128xf32>
    %43 = vector.extract_strided_slice %18 {offsets = [0, 0], sizes = [8, 1], strides = [1, 1]} : vector<8x8xf32> to vector<8x1xf32>
    %44 = vector.broadcast %43 : vector<8x1xf32> to vector<8x128xf32>
    %45 = vector.broadcast %35 : vector<1x128xf32> to vector<8x128xf32>
    %46 = arith.mulf %44, %45 : vector<8x128xf32>
    %47 = arith.addf %42, %46 : vector<8x128xf32>
    %48 = vector.extract_strided_slice %28 {offsets = [0, 0], sizes = [8, 1], strides = [1, 1]} : vector<8x8xf32> to vector<8x1xf32>
    %49 = vector.broadcast %48 : vector<8x1xf32> to vector<8x128xf32>
    %50 = vector.broadcast %36 : vector<1x128xf32> to vector<8x128xf32>
    %51 = arith.mulf %49, %50 : vector<8x128xf32>
    %52 = arith.addf %47, %51 : vector<8x128xf32>
    %53 = vector.extract_strided_slice %32 {offsets = [0, 0], sizes = [8, 1], strides = [1, 1]} : vector<8x8xf32> to vector<8x1xf32>
    %54 = vector.broadcast %53 : vector<8x1xf32> to vector<8x128xf32>
    %55 = vector.broadcast %37 : vector<1x128xf32> to vector<8x128xf32>
    %56 = arith.mulf %54, %55 : vector<8x128xf32>
    %57 = arith.addf %52, %56 : vector<8x128xf32>
    %58 = vector.extract_strided_slice %11 {offsets = [0, 1], sizes = [8, 1], strides = [1, 1]} : vector<8x8xf32> to vector<8x1xf32>
    %59 = vector.broadcast %58 : vector<8x1xf32> to vector<8x128xf32>
    %60 = vector.broadcast %34 : vector<1x128xf32> to vector<8x128xf32>
    %61 = arith.mulf %59, %60 : vector<8x128xf32>
    %62 = vector.extract_strided_slice %18 {offsets = [0, 1], sizes = [8, 1], strides = [1, 1]} : vector<8x8xf32> to vector<8x1xf32>
    %63 = vector.broadcast %62 : vector<8x1xf32> to vector<8x128xf32>
    %64 = vector.broadcast %35 : vector<1x128xf32> to vector<8x128xf32>
    %65 = arith.mulf %63, %64 : vector<8x128xf32>
    %66 = arith.addf %61, %65 : vector<8x128xf32>
    %67 = vector.extract_strided_slice %28 {offsets = [0, 1], sizes = [8, 1], strides = [1, 1]} : vector<8x8xf32> to vector<8x1xf32>
    %68 = vector.broadcast %67 : vector<8x1xf32> to vector<8x128xf32>
    %69 = vector.broadcast %36 : vector<1x128xf32> to vector<8x128xf32>
    %70 = arith.mulf %68, %69 : vector<8x128xf32>
    %71 = arith.addf %66, %70 : vector<8x128xf32>
    %72 = vector.extract_strided_slice %32 {offsets = [0, 1], sizes = [8, 1], strides = [1, 1]} : vector<8x8xf32> to vector<8x1xf32>
    %73 = vector.broadcast %72 : vector<8x1xf32> to vector<8x128xf32>
    %74 = vector.broadcast %37 : vector<1x128xf32> to vector<8x128xf32>
    %75 = arith.mulf %73, %74 : vector<8x128xf32>
    %76 = arith.addf %71, %75 : vector<8x128xf32>
    %77 = vector.extract_strided_slice %11 {offsets = [0, 2], sizes = [8, 1], strides = [1, 1]} : vector<8x8xf32> to vector<8x1xf32>
    %78 = vector.broadcast %77 : vector<8x1xf32> to vector<8x128xf32>
    %79 = vector.broadcast %34 : vector<1x128xf32> to vector<8x128xf32>
    %80 = arith.mulf %78, %79 : vector<8x128xf32>
    %81 = vector.extract_strided_slice %18 {offsets = [0, 2], sizes = [8, 1], strides = [1, 1]} : vector<8x8xf32> to vector<8x1xf32>
    %82 = vector.broadcast %81 : vector<8x1xf32> to vector<8x128xf32>
    %83 = vector.broadcast %35 : vector<1x128xf32> to vector<8x128xf32>
    %84 = arith.mulf %82, %83 : vector<8x128xf32>
    %85 = arith.addf %80, %84 : vector<8x128xf32>
    %86 = vector.extract_strided_slice %28 {offsets = [0, 2], sizes = [8, 1], strides = [1, 1]} : vector<8x8xf32> to vector<8x1xf32>
    %87 = vector.broadcast %86 : vector<8x1xf32> to vector<8x128xf32>
    %88 = vector.broadcast %36 : vector<1x128xf32> to vector<8x128xf32>
    %89 = arith.mulf %87, %88 : vector<8x128xf32>
    %90 = arith.addf %85, %89 : vector<8x128xf32>
    %91 = vector.extract_strided_slice %32 {offsets = [0, 2], sizes = [8, 1], strides = [1, 1]} : vector<8x8xf32> to vector<8x1xf32>
    %92 = vector.broadcast %91 : vector<8x1xf32> to vector<8x128xf32>
    %93 = vector.broadcast %37 : vector<1x128xf32> to vector<8x128xf32>
    %94 = arith.mulf %92, %93 : vector<8x128xf32>
    %95 = arith.addf %90, %94 : vector<8x128xf32>
    %96 = vector.extract_strided_slice %11 {offsets = [0, 3], sizes = [8, 1], strides = [1, 1]} : vector<8x8xf32> to vector<8x1xf32>
    %97 = vector.broadcast %96 : vector<8x1xf32> to vector<8x128xf32>
    %98 = vector.broadcast %34 : vector<1x128xf32> to vector<8x128xf32>
    %99 = arith.mulf %97, %98 : vector<8x128xf32>
    %100 = vector.extract_strided_slice %18 {offsets = [0, 3], sizes = [8, 1], strides = [1, 1]} : vector<8x8xf32> to vector<8x1xf32>
    %101 = vector.broadcast %100 : vector<8x1xf32> to vector<8x128xf32>
    %102 = vector.broadcast %35 : vector<1x128xf32> to vector<8x128xf32>
    %103 = arith.mulf %101, %102 : vector<8x128xf32>
    %104 = arith.addf %99, %103 : vector<8x128xf32>
    %105 = vector.extract_strided_slice %28 {offsets = [0, 3], sizes = [8, 1], strides = [1, 1]} : vector<8x8xf32> to vector<8x1xf32>
    %106 = vector.broadcast %105 : vector<8x1xf32> to vector<8x128xf32>
    %107 = vector.broadcast %36 : vector<1x128xf32> to vector<8x128xf32>
    %108 = arith.mulf %106, %107 : vector<8x128xf32>
    %109 = arith.addf %104, %108 : vector<8x128xf32>
    %110 = vector.extract_strided_slice %32 {offsets = [0, 3], sizes = [8, 1], strides = [1, 1]} : vector<8x8xf32> to vector<8x1xf32>
    %111 = vector.broadcast %110 : vector<8x1xf32> to vector<8x128xf32>
    %112 = vector.broadcast %37 : vector<1x128xf32> to vector<8x128xf32>
    %113 = arith.mulf %111, %112 : vector<8x128xf32>
    %114 = arith.addf %109, %113 : vector<8x128xf32>
    %115 = vector.extract_strided_slice %11 {offsets = [0, 4], sizes = [8, 1], strides = [1, 1]} : vector<8x8xf32> to vector<8x1xf32>
    %116 = vector.broadcast %115 : vector<8x1xf32> to vector<8x128xf32>
    %117 = vector.broadcast %34 : vector<1x128xf32> to vector<8x128xf32>
    %118 = arith.mulf %116, %117 : vector<8x128xf32>
    %119 = vector.extract_strided_slice %18 {offsets = [0, 4], sizes = [8, 1], strides = [1, 1]} : vector<8x8xf32> to vector<8x1xf32>
    %120 = vector.broadcast %119 : vector<8x1xf32> to vector<8x128xf32>
    %121 = vector.broadcast %35 : vector<1x128xf32> to vector<8x128xf32>
    %122 = arith.mulf %120, %121 : vector<8x128xf32>
    %123 = arith.addf %118, %122 : vector<8x128xf32>
    %124 = vector.extract_strided_slice %28 {offsets = [0, 4], sizes = [8, 1], strides = [1, 1]} : vector<8x8xf32> to vector<8x1xf32>
    %125 = vector.broadcast %124 : vector<8x1xf32> to vector<8x128xf32>
    %126 = vector.broadcast %36 : vector<1x128xf32> to vector<8x128xf32>
    %127 = arith.mulf %125, %126 : vector<8x128xf32>
    %128 = arith.addf %123, %127 : vector<8x128xf32>
    %129 = vector.extract_strided_slice %32 {offsets = [0, 4], sizes = [8, 1], strides = [1, 1]} : vector<8x8xf32> to vector<8x1xf32>
    %130 = vector.broadcast %129 : vector<8x1xf32> to vector<8x128xf32>
    %131 = vector.broadcast %37 : vector<1x128xf32> to vector<8x128xf32>
    %132 = arith.mulf %130, %131 : vector<8x128xf32>
    %133 = arith.addf %128, %132 : vector<8x128xf32>
    %134 = vector.extract_strided_slice %11 {offsets = [0, 5], sizes = [8, 1], strides = [1, 1]} : vector<8x8xf32> to vector<8x1xf32>
    %135 = vector.broadcast %134 : vector<8x1xf32> to vector<8x128xf32>
    %136 = vector.broadcast %34 : vector<1x128xf32> to vector<8x128xf32>
    %137 = arith.mulf %135, %136 : vector<8x128xf32>
    %138 = vector.extract_strided_slice %18 {offsets = [0, 5], sizes = [8, 1], strides = [1, 1]} : vector<8x8xf32> to vector<8x1xf32>
    %139 = vector.broadcast %138 : vector<8x1xf32> to vector<8x128xf32>
    %140 = vector.broadcast %35 : vector<1x128xf32> to vector<8x128xf32>
    %141 = arith.mulf %139, %140 : vector<8x128xf32>
    %142 = arith.addf %137, %141 : vector<8x128xf32>
    %143 = vector.extract_strided_slice %28 {offsets = [0, 5], sizes = [8, 1], strides = [1, 1]} : vector<8x8xf32> to vector<8x1xf32>
    %144 = vector.broadcast %143 : vector<8x1xf32> to vector<8x128xf32>
    %145 = vector.broadcast %36 : vector<1x128xf32> to vector<8x128xf32>
    %146 = arith.mulf %144, %145 : vector<8x128xf32>
    %147 = arith.addf %142, %146 : vector<8x128xf32>
    %148 = vector.extract_strided_slice %32 {offsets = [0, 5], sizes = [8, 1], strides = [1, 1]} : vector<8x8xf32> to vector<8x1xf32>
    %149 = vector.broadcast %148 : vector<8x1xf32> to vector<8x128xf32>
    %150 = vector.broadcast %37 : vector<1x128xf32> to vector<8x128xf32>
    %151 = arith.mulf %149, %150 : vector<8x128xf32>
    %152 = arith.addf %147, %151 : vector<8x128xf32>
    %153 = vector.extract_strided_slice %11 {offsets = [0, 6], sizes = [8, 1], strides = [1, 1]} : vector<8x8xf32> to vector<8x1xf32>
    %154 = vector.broadcast %153 : vector<8x1xf32> to vector<8x128xf32>
    %155 = vector.broadcast %34 : vector<1x128xf32> to vector<8x128xf32>
    %156 = arith.mulf %154, %155 : vector<8x128xf32>
    %157 = vector.extract_strided_slice %18 {offsets = [0, 6], sizes = [8, 1], strides = [1, 1]} : vector<8x8xf32> to vector<8x1xf32>
    %158 = vector.broadcast %157 : vector<8x1xf32> to vector<8x128xf32>
    %159 = vector.broadcast %35 : vector<1x128xf32> to vector<8x128xf32>
    %160 = arith.mulf %158, %159 : vector<8x128xf32>
    %161 = arith.addf %156, %160 : vector<8x128xf32>
    %162 = vector.extract_strided_slice %28 {offsets = [0, 6], sizes = [8, 1], strides = [1, 1]} : vector<8x8xf32> to vector<8x1xf32>
    %163 = vector.broadcast %162 : vector<8x1xf32> to vector<8x128xf32>
    %164 = vector.broadcast %36 : vector<1x128xf32> to vector<8x128xf32>
    %165 = arith.mulf %163, %164 : vector<8x128xf32>
    %166 = arith.addf %161, %165 : vector<8x128xf32>
    %167 = vector.extract_strided_slice %32 {offsets = [0, 6], sizes = [8, 1], strides = [1, 1]} : vector<8x8xf32> to vector<8x1xf32>
    %168 = vector.broadcast %167 : vector<8x1xf32> to vector<8x128xf32>
    %169 = vector.broadcast %37 : vector<1x128xf32> to vector<8x128xf32>
    %170 = arith.mulf %168, %169 : vector<8x128xf32>
    %171 = arith.addf %166, %170 : vector<8x128xf32>
    %172 = vector.extract_strided_slice %11 {offsets = [0, 7], sizes = [8, 1], strides = [1, 1]} : vector<8x8xf32> to vector<8x1xf32>
    %173 = vector.broadcast %172 : vector<8x1xf32> to vector<8x128xf32>
    %174 = vector.broadcast %34 : vector<1x128xf32> to vector<8x128xf32>
    %175 = arith.mulf %173, %174 : vector<8x128xf32>
    %176 = vector.extract_strided_slice %18 {offsets = [0, 7], sizes = [8, 1], strides = [1, 1]} : vector<8x8xf32> to vector<8x1xf32>
    %177 = vector.broadcast %176 : vector<8x1xf32> to vector<8x128xf32>
    %178 = vector.broadcast %35 : vector<1x128xf32> to vector<8x128xf32>
    %179 = arith.mulf %177, %178 : vector<8x128xf32>
    %180 = arith.addf %175, %179 : vector<8x128xf32>
    %181 = vector.extract_strided_slice %28 {offsets = [0, 7], sizes = [8, 1], strides = [1, 1]} : vector<8x8xf32> to vector<8x1xf32>
    %182 = vector.broadcast %181 : vector<8x1xf32> to vector<8x128xf32>
    %183 = vector.broadcast %36 : vector<1x128xf32> to vector<8x128xf32>
    %184 = arith.mulf %182, %183 : vector<8x128xf32>
    %185 = arith.addf %180, %184 : vector<8x128xf32>
    %186 = vector.extract_strided_slice %32 {offsets = [0, 7], sizes = [8, 1], strides = [1, 1]} : vector<8x8xf32> to vector<8x1xf32>
    %187 = vector.broadcast %186 : vector<8x1xf32> to vector<8x128xf32>
    %188 = vector.broadcast %37 : vector<1x128xf32> to vector<8x128xf32>
    %189 = arith.mulf %187, %188 : vector<8x128xf32>
    %190 = arith.addf %185, %189 : vector<8x128xf32>
    %cst_14 = arith.constant 0.000000e+00 : f32
    %191 = vector.broadcast %cst_14 : f32 to vector<8x32xf32>
    %192 = arith.negf %57 : vector<8x128xf32>
    %193 = math.exp %192 : vector<8x128xf32>
    %cst_15 = arith.constant 1.000000e+00 : f32
    %194 = vector.broadcast %cst_15 : f32 to vector<8x128xf32>
    %195 = arith.addf %194, %193 : vector<8x128xf32>
    %196 = arith.divf %194, %195 : vector<8x128xf32>
    %197 = vector.extract_strided_slice %196 {offsets = [0, 0], sizes = [8, 32], strides = [1, 1]} : vector<8x128xf32> to vector<8x32xf32>
    %198 = vector.extract_strided_slice %196 {offsets = [0, 32], sizes = [8, 32], strides = [1, 1]} : vector<8x128xf32> to vector<8x32xf32>
    %199 = vector.extract_strided_slice %196 {offsets = [0, 96], sizes = [8, 32], strides = [1, 1]} : vector<8x128xf32> to vector<8x32xf32>
    %200 = vector.extract_strided_slice %57 {offsets = [0, 64], sizes = [8, 32], strides = [1, 1]} : vector<8x128xf32> to vector<8x32xf32>
    %201 = math.tanh %200 : vector<8x32xf32>
    %202 = arith.mulf %198, %191 : vector<8x32xf32>
    %203 = arith.mulf %197, %201 : vector<8x32xf32>
    %204 = arith.addf %202, %203 : vector<8x32xf32>
    %205 = math.tanh %204 : vector<8x32xf32>
    %206 = arith.mulf %199, %205 : vector<8x32xf32>
    %cst_16 = arith.constant dense<0.000000e+00> : vector<8x128xf32>
    %207 = tpu.matmul %206, %38, %cst_16 {dimension_numbers = #tpu.dot_dimension_numbers<[1], [0], [0], [1], [0, 0, 1, 1], [], []>} : vector<8x32xf32>, vector<32x128xf32>, vector<8x128xf32> -> vector<8x128xf32>
    %208 = arith.addf %76, %207 : vector<8x128xf32>
    %209 = arith.negf %208 : vector<8x128xf32>
    %210 = math.exp %209 : vector<8x128xf32>
    %cst_17 = arith.constant 1.000000e+00 : f32
    %211 = vector.broadcast %cst_17 : f32 to vector<8x128xf32>
    %212 = arith.addf %211, %210 : vector<8x128xf32>
    %213 = arith.divf %211, %212 : vector<8x128xf32>
    %214 = vector.extract_strided_slice %213 {offsets = [0, 0], sizes = [8, 32], strides = [1, 1]} : vector<8x128xf32> to vector<8x32xf32>
    %215 = vector.extract_strided_slice %213 {offsets = [0, 32], sizes = [8, 32], strides = [1, 1]} : vector<8x128xf32> to vector<8x32xf32>
    %216 = vector.extract_strided_slice %213 {offsets = [0, 96], sizes = [8, 32], strides = [1, 1]} : vector<8x128xf32> to vector<8x32xf32>
    %217 = vector.extract_strided_slice %208 {offsets = [0, 64], sizes = [8, 32], strides = [1, 1]} : vector<8x128xf32> to vector<8x32xf32>
    %218 = math.tanh %217 : vector<8x32xf32>
    %219 = arith.mulf %215, %204 : vector<8x32xf32>
    %220 = arith.mulf %214, %218 : vector<8x32xf32>
    %221 = arith.addf %219, %220 : vector<8x32xf32>
    %222 = math.tanh %221 : vector<8x32xf32>
    %223 = arith.mulf %216, %222 : vector<8x32xf32>
    %cst_18 = arith.constant dense<0.000000e+00> : vector<8x128xf32>
    %224 = tpu.matmul %223, %38, %cst_18 {dimension_numbers = #tpu.dot_dimension_numbers<[1], [0], [0], [1], [0, 0, 1, 1], [], []>} : vector<8x32xf32>, vector<32x128xf32>, vector<8x128xf32> -> vector<8x128xf32>
    %225 = arith.addf %95, %224 : vector<8x128xf32>
    %226 = arith.negf %225 : vector<8x128xf32>
    %227 = math.exp %226 : vector<8x128xf32>
    %cst_19 = arith.constant 1.000000e+00 : f32
    %228 = vector.broadcast %cst_19 : f32 to vector<8x128xf32>
    %229 = arith.addf %228, %227 : vector<8x128xf32>
    %230 = arith.divf %228, %229 : vector<8x128xf32>
    %231 = vector.extract_strided_slice %230 {offsets = [0, 0], sizes = [8, 32], strides = [1, 1]} : vector<8x128xf32> to vector<8x32xf32>
    %232 = vector.extract_strided_slice %230 {offsets = [0, 32], sizes = [8, 32], strides = [1, 1]} : vector<8x128xf32> to vector<8x32xf32>
    %233 = vector.extract_strided_slice %230 {offsets = [0, 96], sizes = [8, 32], strides = [1, 1]} : vector<8x128xf32> to vector<8x32xf32>
    %234 = vector.extract_strided_slice %225 {offsets = [0, 64], sizes = [8, 32], strides = [1, 1]} : vector<8x128xf32> to vector<8x32xf32>
    %235 = math.tanh %234 : vector<8x32xf32>
    %236 = arith.mulf %232, %221 : vector<8x32xf32>
    %237 = arith.mulf %231, %235 : vector<8x32xf32>
    %238 = arith.addf %236, %237 : vector<8x32xf32>
    %239 = math.tanh %238 : vector<8x32xf32>
    %240 = arith.mulf %233, %239 : vector<8x32xf32>
    %cst_20 = arith.constant dense<0.000000e+00> : vector<8x128xf32>
    %241 = tpu.matmul %240, %38, %cst_20 {dimension_numbers = #tpu.dot_dimension_numbers<[1], [0], [0], [1], [0, 0, 1, 1], [], []>} : vector<8x32xf32>, vector<32x128xf32>, vector<8x128xf32> -> vector<8x128xf32>
    %242 = arith.addf %114, %241 : vector<8x128xf32>
    %243 = arith.negf %242 : vector<8x128xf32>
    %244 = math.exp %243 : vector<8x128xf32>
    %cst_21 = arith.constant 1.000000e+00 : f32
    %245 = vector.broadcast %cst_21 : f32 to vector<8x128xf32>
    %246 = arith.addf %245, %244 : vector<8x128xf32>
    %247 = arith.divf %245, %246 : vector<8x128xf32>
    %248 = vector.extract_strided_slice %247 {offsets = [0, 0], sizes = [8, 32], strides = [1, 1]} : vector<8x128xf32> to vector<8x32xf32>
    %249 = vector.extract_strided_slice %247 {offsets = [0, 32], sizes = [8, 32], strides = [1, 1]} : vector<8x128xf32> to vector<8x32xf32>
    %250 = vector.extract_strided_slice %247 {offsets = [0, 96], sizes = [8, 32], strides = [1, 1]} : vector<8x128xf32> to vector<8x32xf32>
    %251 = vector.extract_strided_slice %242 {offsets = [0, 64], sizes = [8, 32], strides = [1, 1]} : vector<8x128xf32> to vector<8x32xf32>
    %252 = math.tanh %251 : vector<8x32xf32>
    %253 = arith.mulf %249, %238 : vector<8x32xf32>
    %254 = arith.mulf %248, %252 : vector<8x32xf32>
    %255 = arith.addf %253, %254 : vector<8x32xf32>
    %256 = math.tanh %255 : vector<8x32xf32>
    %257 = arith.mulf %250, %256 : vector<8x32xf32>
    %cst_22 = arith.constant dense<0.000000e+00> : vector<8x128xf32>
    %258 = tpu.matmul %257, %38, %cst_22 {dimension_numbers = #tpu.dot_dimension_numbers<[1], [0], [0], [1], [0, 0, 1, 1], [], []>} : vector<8x32xf32>, vector<32x128xf32>, vector<8x128xf32> -> vector<8x128xf32>
    %259 = arith.addf %133, %258 : vector<8x128xf32>
    %260 = arith.negf %259 : vector<8x128xf32>
    %261 = math.exp %260 : vector<8x128xf32>
    %cst_23 = arith.constant 1.000000e+00 : f32
    %262 = vector.broadcast %cst_23 : f32 to vector<8x128xf32>
    %263 = arith.addf %262, %261 : vector<8x128xf32>
    %264 = arith.divf %262, %263 : vector<8x128xf32>
    %265 = vector.extract_strided_slice %264 {offsets = [0, 0], sizes = [8, 32], strides = [1, 1]} : vector<8x128xf32> to vector<8x32xf32>
    %266 = vector.extract_strided_slice %264 {offsets = [0, 32], sizes = [8, 32], strides = [1, 1]} : vector<8x128xf32> to vector<8x32xf32>
    %267 = vector.extract_strided_slice %264 {offsets = [0, 96], sizes = [8, 32], strides = [1, 1]} : vector<8x128xf32> to vector<8x32xf32>
    %268 = vector.extract_strided_slice %259 {offsets = [0, 64], sizes = [8, 32], strides = [1, 1]} : vector<8x128xf32> to vector<8x32xf32>
    %269 = math.tanh %268 : vector<8x32xf32>
    %270 = arith.mulf %266, %255 : vector<8x32xf32>
    %271 = arith.mulf %265, %269 : vector<8x32xf32>
    %272 = arith.addf %270, %271 : vector<8x32xf32>
    %273 = math.tanh %272 : vector<8x32xf32>
    %274 = arith.mulf %267, %273 : vector<8x32xf32>
    %cst_24 = arith.constant dense<0.000000e+00> : vector<8x128xf32>
    %275 = tpu.matmul %274, %38, %cst_24 {dimension_numbers = #tpu.dot_dimension_numbers<[1], [0], [0], [1], [0, 0, 1, 1], [], []>} : vector<8x32xf32>, vector<32x128xf32>, vector<8x128xf32> -> vector<8x128xf32>
    %276 = arith.addf %152, %275 : vector<8x128xf32>
    %277 = arith.negf %276 : vector<8x128xf32>
    %278 = math.exp %277 : vector<8x128xf32>
    %cst_25 = arith.constant 1.000000e+00 : f32
    %279 = vector.broadcast %cst_25 : f32 to vector<8x128xf32>
    %280 = arith.addf %279, %278 : vector<8x128xf32>
    %281 = arith.divf %279, %280 : vector<8x128xf32>
    %282 = vector.extract_strided_slice %281 {offsets = [0, 0], sizes = [8, 32], strides = [1, 1]} : vector<8x128xf32> to vector<8x32xf32>
    %283 = vector.extract_strided_slice %281 {offsets = [0, 32], sizes = [8, 32], strides = [1, 1]} : vector<8x128xf32> to vector<8x32xf32>
    %284 = vector.extract_strided_slice %281 {offsets = [0, 96], sizes = [8, 32], strides = [1, 1]} : vector<8x128xf32> to vector<8x32xf32>
    %285 = vector.extract_strided_slice %276 {offsets = [0, 64], sizes = [8, 32], strides = [1, 1]} : vector<8x128xf32> to vector<8x32xf32>
    %286 = math.tanh %285 : vector<8x32xf32>
    %287 = arith.mulf %283, %272 : vector<8x32xf32>
    %288 = arith.mulf %282, %286 : vector<8x32xf32>
    %289 = arith.addf %287, %288 : vector<8x32xf32>
    %290 = math.tanh %289 : vector<8x32xf32>
    %291 = arith.mulf %284, %290 : vector<8x32xf32>
    %cst_26 = arith.constant dense<0.000000e+00> : vector<8x128xf32>
    %292 = tpu.matmul %291, %38, %cst_26 {dimension_numbers = #tpu.dot_dimension_numbers<[1], [0], [0], [1], [0, 0, 1, 1], [], []>} : vector<8x32xf32>, vector<32x128xf32>, vector<8x128xf32> -> vector<8x128xf32>
    %293 = arith.addf %171, %292 : vector<8x128xf32>
    %294 = arith.negf %293 : vector<8x128xf32>
    %295 = math.exp %294 : vector<8x128xf32>
    %cst_27 = arith.constant 1.000000e+00 : f32
    %296 = vector.broadcast %cst_27 : f32 to vector<8x128xf32>
    %297 = arith.addf %296, %295 : vector<8x128xf32>
    %298 = arith.divf %296, %297 : vector<8x128xf32>
    %299 = vector.extract_strided_slice %298 {offsets = [0, 0], sizes = [8, 32], strides = [1, 1]} : vector<8x128xf32> to vector<8x32xf32>
    %300 = vector.extract_strided_slice %298 {offsets = [0, 32], sizes = [8, 32], strides = [1, 1]} : vector<8x128xf32> to vector<8x32xf32>
    %301 = vector.extract_strided_slice %298 {offsets = [0, 96], sizes = [8, 32], strides = [1, 1]} : vector<8x128xf32> to vector<8x32xf32>
    %302 = vector.extract_strided_slice %293 {offsets = [0, 64], sizes = [8, 32], strides = [1, 1]} : vector<8x128xf32> to vector<8x32xf32>
    %303 = math.tanh %302 : vector<8x32xf32>
    %304 = arith.mulf %300, %289 : vector<8x32xf32>
    %305 = arith.mulf %299, %303 : vector<8x32xf32>
    %306 = arith.addf %304, %305 : vector<8x32xf32>
    %307 = math.tanh %306 : vector<8x32xf32>
    %308 = arith.mulf %301, %307 : vector<8x32xf32>
    %cst_28 = arith.constant dense<0.000000e+00> : vector<8x128xf32>
    %309 = tpu.matmul %308, %38, %cst_28 {dimension_numbers = #tpu.dot_dimension_numbers<[1], [0], [0], [1], [0, 0, 1, 1], [], []>} : vector<8x32xf32>, vector<32x128xf32>, vector<8x128xf32> -> vector<8x128xf32>
    %310 = arith.addf %190, %309 : vector<8x128xf32>
    %311 = arith.negf %310 : vector<8x128xf32>
    %312 = math.exp %311 : vector<8x128xf32>
    %cst_29 = arith.constant 1.000000e+00 : f32
    %313 = vector.broadcast %cst_29 : f32 to vector<8x128xf32>
    %314 = arith.addf %313, %312 : vector<8x128xf32>
    %315 = arith.divf %313, %314 : vector<8x128xf32>
    %316 = vector.extract_strided_slice %315 {offsets = [0, 0], sizes = [8, 32], strides = [1, 1]} : vector<8x128xf32> to vector<8x32xf32>
    %317 = vector.extract_strided_slice %315 {offsets = [0, 32], sizes = [8, 32], strides = [1, 1]} : vector<8x128xf32> to vector<8x32xf32>
    %318 = vector.extract_strided_slice %315 {offsets = [0, 96], sizes = [8, 32], strides = [1, 1]} : vector<8x128xf32> to vector<8x32xf32>
    %319 = vector.extract_strided_slice %310 {offsets = [0, 64], sizes = [8, 32], strides = [1, 1]} : vector<8x128xf32> to vector<8x32xf32>
    %320 = math.tanh %319 : vector<8x32xf32>
    %321 = arith.mulf %317, %306 : vector<8x32xf32>
    %322 = arith.mulf %316, %320 : vector<8x32xf32>
    %323 = arith.addf %321, %322 : vector<8x32xf32>
    %324 = math.tanh %323 : vector<8x32xf32>
    %325 = arith.mulf %318, %324 : vector<8x32xf32>
    %c0_30 = arith.constant 0 : index
    %c0_31 = arith.constant 0 : index
    %326 = vector.load %arg3[%c0_30, %c0_31] : memref<1x32xf32, #tpu.memory_space<vmem>>, vector<1x32xf32>
    %327 = vector.broadcast %326 : vector<1x32xf32> to vector<8x32xf32>
    %328 = arith.mulf %325, %327 : vector<8x32xf32>
    %cst_32 = arith.constant dense<0.000000e+00> : vector<8xf32>
    %329 = vector.multi_reduction <add>, %328, %cst_32 [1] : vector<8x32xf32> to vector<8xf32>
    %330 = vector.shape_cast %329 : vector<8xf32> to vector<8x1xf32>
    %c0_33 = arith.constant 0 : index
    %c0_34 = arith.constant 0 : index
    %331 = vector.load %arg4[%c0_33, %c0_34] : memref<1x1xf32, #tpu.memory_space<vmem>>, vector<1x1xf32>
    %332 = vector.broadcast %331 : vector<1x1xf32> to vector<8x1xf32>
    %333 = arith.addf %330, %332 : vector<8x1xf32>
    %c0_35 = arith.constant 0 : index
    %c0_36 = arith.constant 0 : index
    %334 = vector.load %arg5[%c0_35, %c0_36] : memref<8x1xf32, #tpu.memory_space<vmem>>, vector<8x1xf32>
    tpu.vector_store %arg5[%c0_35, %c0_36], %333 {strides = array<i32>} : memref<8x1xf32, #tpu.memory_space<vmem>>, vector<8x1xf32>,
    return
  }
}

</mosaic_0001>

<llo_original>
// kernel: simple_lstm_forward.1
$region0: #{simple_lstm_forward.1}
  #allocation0 [shape = 'u32[]', space=smem, size = 0x4, offset = 0x4, fixed_abs, tag = 'smem constant byte address 0x4 - core index']
  #allocation1 [shape = 'u32[144,128]{1,0:T(1,128)}', space=vmem, size = 0x12000, scoped, tag = 'internal scratch']
  #allocation2 [shape = 'f32[1,1]{1,0:T(1,128)S(1)}', space=vmem, size = 0x200, scoped, tag = 'scoped memory for simple_lstm_forward.1']
  %s0 = inlined_call_operand.vmem [shape: f32[8,32], index: 0, kind: input, shape index: {}]
  %s1 = inlined_call_operand.vmem [shape: f32[4,128], index: 1, kind: input, shape index: {}]
  %s2 = inlined_call_operand.vmem [shape: f32[32,128], index: 2, kind: input, shape index: {}]
  %s3 = inlined_call_operand.hbm [shape: f32[1,32], index: 3, kind: input, shape index: {}]
  %s4 = inlined_call_operand.<no memory space> [shape: f32[1,1], index: 4, kind: input, shape index: {}]
  %s5 = inlined_call_operand.vmem [shape: f32[8,1], index: 5, kind: output, shape index: {}]
  %s6 = sld [smem:[#allocation0]]
  $region34: #{simple_lstm_forward.1} parent=0
    _
  %s8 = ssub.s32 1, %s6
  %s9 = scalar_select 0, %s8, %s6
  %v10 = vstv %s4
  %11 = vst [vmem:[#allocation2] sm:$0x1] %v10
  $region1: #{simple_lstm_forward.1} parent=0
    #allocation3 [shape = 'u8[512]{0}', space=vmem, size = 0x400, scoped, tag = 'input window, operand 3, single buffered']
    #allocation4 [shape = 's32[1]{0}', space=sflag, size = 0x4, scoped, tag = 'scoped memory for simple_lstm_forward.1']
    %12 = vsyncpa [#allocation4], 0
    // Predicated region
    $region2: #{simple_lstm_forward.1} parent=1 // pred_check
      _
    $region3: #{simple_lstm_forward.1} parent=1 // pred_check_branch
      %14 = sbr.rel (0) target = $region5
    $region4: #{simple_lstm_forward.1} parent=1 // pred_region
      _
    $region5: #{simple_lstm_forward.1} parent=1 // pred_fallthru
      _
    // Predicated region
    $region6: #{simple_lstm_forward.1} parent=1 // pred_check
      _
    $region7: #{simple_lstm_forward.1} parent=1 // pred_check_branch
      %16 = sbr.rel (0) target = $region9
    $region8: #{simple_lstm_forward.1} parent=1 // pred_region
      _
    $region9: #{simple_lstm_forward.1} parent=1 // pred_fallthru
      _
    // Predicated region
    $region10: #{simple_lstm_forward.1} parent=1 // pred_check
      _
    $region11: #{simple_lstm_forward.1} parent=1 // pred_check_branch
      %18 = sbr.rel (0) target = $region13
    $region12: #{simple_lstm_forward.1} parent=1 // pred_region
      _
    $region13: #{simple_lstm_forward.1} parent=1 // pred_fallthru
      _
    // Predicated region
    $region14: #{simple_lstm_forward.1} parent=1 // pred_check
      _
    $region15: #{simple_lstm_forward.1} parent=1 // pred_check_branch
      %20 = sbr.rel (0) target = $region17
    $region16: #{simple_lstm_forward.1} parent=1 // pred_region
      %s22 = ssub.s32 16, 16
      %23 = vsyncadd [#allocation4], %s22
      %s25 = sshll.u32 [#allocation3], 4
      %s26 = int_to_ptr.vmem [resolvable:$true] %s25
      %28 = dma.hbm_to_vmem [thread:$0]  %s3, 16, %s26, [#allocation4]
    $region17: #{simple_lstm_forward.1} parent=1 // pred_fallthru
      _
    // Predicated region
    $region18: #{simple_lstm_forward.1} parent=1 // pred_check
      _
    $region19: #{simple_lstm_forward.1} parent=1 // pred_check_branch
      %30 = sbr.rel (0) target = $region21
    $region20: #{simple_lstm_forward.1} parent=1 // pred_region
      _
    $region21: #{simple_lstm_forward.1} parent=1 // pred_fallthru
      _
    // Predicated region
    $region22: #{simple_lstm_forward.1} parent=1 // pred_check
      _
    $region23: #{simple_lstm_forward.1} parent=1 // pred_check_branch
      %32 = sbr.rel (0) target = $region25
    $region24: #{simple_lstm_forward.1} parent=1 // pred_region
      %33 = dma.done [#allocation4], 16
    $region25: #{simple_lstm_forward.1} parent=1 // pred_fallthru
      _
    %v34 = vld [vmem:[%s0] sm:$0xff]
    %36 = vrot.lane.b32.xlu0 %v34, 120
    %v37 = vpop.permute.xlu0 %36
    %v39 = vmax.f32 %v34, %v37
    %41 = vrot.lane.b32.xlu0 %v39, 112
    %v42 = vpop.permute.xlu0 %41
    %v44 = vmax.f32 %v39, %v42
    %vm45 = vcmp.eq.f32.partialorder %v34, %v44
    %v46 = vsel %vm45, 1.0, 0.0
    %48 = vrot.lane.b32.xlu0 %v44, 8
    %v49 = vpop.permute.xlu0 %48
    %vm51 = vcmp.eq.f32.partialorder %v34, %v49
    %v52 = vsel %vm51, 1.0, 0.0
    %v53 = vsub.f32 1.0, %v46
    %55 = vrot.lane.b32.xlu0 %v53, 8
    %v56 = vpop.permute.xlu0 %55
    %v58 = vmul.f32 %v52, %v56
    %59 = vrot.lane.b32.xlu0 %v44, 16
    %v60 = vpop.permute.xlu0 %59
    %vm62 = vcmp.eq.f32.partialorder %v34, %v60
    %v63 = vsel %vm62, 1.0, 0.0
    %64 = vrot.lane.b32.xlu0 %v53, 16
    %v65 = vpop.permute.xlu0 %64
    %v67 = vmul.f32 %v63, %v65
    %v68 = vsub.f32 1.0, %v58
    %70 = vrot.lane.b32.xlu0 %v68, 8
    %v71 = vpop.permute.xlu0 %70
    %v73 = vmul.f32 %v67, %v71
    %75 = vrot.lane.b32.xlu0 %v58, 120
    %v76 = vpop.permute.xlu0 %75
    %v78 = vsub.f32 %v53, %v76
    %80 = vrot.lane.b32.xlu0 %v73, 112
    %v81 = vpop.permute.xlu0 %80
    %v83 = vsub.f32 %v78, %v81
    %v84 = vld [vmem:[%s1] sm:$0xf]
    %v85 = vld [vmem:[%s2] sm:$0xff]
    %v86 = vld [vmem:[%s2 + $0x8] sm:$0xff]
    %v87 = vld [vmem:[%s2 + $0x10] sm:$0xff]
    %v88 = vld [vmem:[%s2 + $0x18] sm:$0xff]
    %90 = vset.pattern.permute.xlu0 0
    %91 = vperm.xlu0 %90, %v46
    %v92 = vpop.permute.xlu0 %91
    %v94 = vlaneseq
    %v95 = vshrl.u32 %v94, 7
    %v96 = vsub.s32 0, %v95
    %v97 = vrot.slane %v84, %v96
    %v98 = vmul.f32 %v92, %v97
    %99 = vset.pattern.permute.xlu0 8
    %100 = vperm.xlu0 %99, %v58
    %v101 = vpop.permute.xlu0 %100
    %v103 = vlaneseq
    %v104 = vshrl.u32 %v103, 7
    %v105 = vsub.s32 1, %v104
    %v106 = vrot.slane %v84, %v105
    %v107 = vmul.f32 %v101, %v106
    %v108 = vadd.f32 %v98, %v107
    %109 = vset.pattern.permute.xlu0 16
    %110 = vperm.xlu0 %109, %v73
    %v111 = vpop.permute.xlu0 %110
    %v113 = vlaneseq
    %v114 = vshrl.u32 %v113, 7
    %v115 = vsub.s32 2, %v114
    %v116 = vrot.slane %v84, %v115
    %v117 = vmul.f32 %v111, %v116
    %v118 = vadd.f32 %v108, %v117
    %120 = vset.pattern.permute.xlu0 0
    %121 = vperm.xlu0 %120, %v83
    %v122 = vpop.permute.xlu0 %121
    %v124 = vlaneseq
    %v125 = vshrl.u32 %v124, 7
    %v126 = vsub.s32 3, %v125
    %v127 = vrot.slane %v84, %v126
    %v128 = vmul.f32 %v122, %v127
    %v129 = vadd.f32 %v118, %v128
    %130 = vset.pattern.permute.xlu0 1
    %131 = vperm.xlu0 %130, %v46
    %v132 = vpop.permute.xlu0 %131
    %v134 = vmul.f32 %v132, %v97
    %135 = vset.pattern.permute.xlu0 9
    %136 = vperm.xlu0 %135, %v58
    %v137 = vpop.permute.xlu0 %136
    %v139 = vmul.f32 %v137, %v106
    %v140 = vadd.f32 %v134, %v139
    %141 = vset.pattern.permute.xlu0 17
    %142 = vperm.xlu0 %141, %v73
    %v143 = vpop.permute.xlu0 %142
    %v145 = vmul.f32 %v143, %v116
    %v146 = vadd.f32 %v140, %v145
    %147 = vset.pattern.permute.xlu0 1
    %148 = vperm.xlu0 %147, %v83
    %v149 = vpop.permute.xlu0 %148
    %v151 = vmul.f32 %v149, %v127
    %v152 = vadd.f32 %v146, %v151
    %153 = vset.pattern.permute.xlu0 2
    %154 = vperm.xlu0 %153, %v46
    %v155 = vpop.permute.xlu0 %154
    %v157 = vmul.f32 %v155, %v97
    %158 = vset.pattern.permute.xlu0 10
    %159 = vperm.xlu0 %158, %v58
    %v160 = vpop.permute.xlu0 %159
    %v162 = vmul.f32 %v160, %v106
    %v163 = vadd.f32 %v157, %v162
    %164 = vset.pattern.permute.xlu0 18
    %165 = vperm.xlu0 %164, %v73
    %v166 = vpop.permute.xlu0 %165
    %v168 = vmul.f32 %v166, %v116
    %v169 = vadd.f32 %v163, %v168
    %170 = vset.pattern.permute.xlu0 2
    %171 = vperm.xlu0 %170, %v83
    %v172 = vpop.permute.xlu0 %171
    %v174 = vmul.f32 %v172, %v127
    %v175 = vadd.f32 %v169, %v174
    %176 = vset.pattern.permute.xlu0 3
    %177 = vperm.xlu0 %176, %v46
    %v178 = vpop.permute.xlu0 %177
    %v180 = vmul.f32 %v178, %v97
    %181 = vset.pattern.permute.xlu0 11
    %182 = vperm.xlu0 %181, %v58
    %v183 = vpop.permute.xlu0 %182
    %v185 = vmul.f32 %v183, %v106
    %v186 = vadd.f32 %v180, %v185
    %187 = vset.pattern.permute.xlu0 19
    %188 = vperm.xlu0 %187, %v73
    %v189 = vpop.permute.xlu0 %188
    %v191 = vmul.f32 %v189, %v116
    %v192 = vadd.f32 %v186, %v191
    %193 = vset.pattern.permute.xlu0 3
    %194 = vperm.xlu0 %193, %v83
    %v195 = vpop.permute.xlu0 %194
    %v197 = vmul.f32 %v195, %v127
    %v198 = vadd.f32 %v192, %v197
    %199 = vset.pattern.permute.xlu0 4
    %200 = vperm.xlu0 %199, %v46
    %v201 = vpop.permute.xlu0 %200
    %v203 = vmul.f32 %v201, %v97
    %204 = vset.pattern.permute.xlu0 12
    %205 = vperm.xlu0 %204, %v58
    %v206 = vpop.permute.xlu0 %205
    %v208 = vmul.f32 %v206, %v106
    %v209 = vadd.f32 %v203, %v208
    %210 = vset.pattern.permute.xlu0 20
    %211 = vperm.xlu0 %210, %v73
    %v212 = vpop.permute.xlu0 %211
    %v214 = vmul.f32 %v212, %v116
    %v215 = vadd.f32 %v209, %v214
    %216 = vset.pattern.permute.xlu0 4
    %217 = vperm.xlu0 %216, %v83
    %v218 = vpop.permute.xlu0 %217
    %v220 = vmul.f32 %v218, %v127
    %v221 = vadd.f32 %v215, %v220
    %222 = vset.pattern.permute.xlu0 5
    %223 = vperm.xlu0 %222, %v46
    %v224 = vpop.permute.xlu0 %223
    %v226 = vmul.f32 %v224, %v97
    %227 = vset.pattern.permute.xlu0 13
    %228 = vperm.xlu0 %227, %v58
    %v229 = vpop.permute.xlu0 %228
    %v231 = vmul.f32 %v229, %v106
    %v232 = vadd.f32 %v226, %v231
    %233 = vset.pattern.permute.xlu0 21
    %234 = vperm.xlu0 %233, %v73
    %v235 = vpop.permute.xlu0 %234
    %v237 = vmul.f32 %v235, %v116
    %v238 = vadd.f32 %v232, %v237
    %239 = vset.pattern.permute.xlu0 5
    %240 = vperm.xlu0 %239, %v83
    %v241 = vpop.permute.xlu0 %240
    %v243 = vmul.f32 %v241, %v127
    %v244 = vadd.f32 %v238, %v243
    %245 = vset.pattern.permute.xlu0 6
    %246 = vperm.xlu0 %245, %v46
    %v247 = vpop.permute.xlu0 %246
    %v249 = vmul.f32 %v247, %v97
    %250 = vset.pattern.permute.xlu0 14
    %251 = vperm.xlu0 %250, %v58
    %v252 = vpop.permute.xlu0 %251
    %v254 = vmul.f32 %v252, %v106
    %v255 = vadd.f32 %v249, %v254
    %256 = vset.pattern.permute.xlu0 22
    %257 = vperm.xlu0 %256, %v73
    %v258 = vpop.permute.xlu0 %257
    %v260 = vmul.f32 %v258, %v116
    %v261 = vadd.f32 %v255, %v260
    %262 = vset.pattern.permute.xlu0 6
    %263 = vperm.xlu0 %262, %v83
    %v264 = vpop.permute.xlu0 %263
    %v266 = vmul.f32 %v264, %v127
    %v267 = vadd.f32 %v261, %v266
    %268 = vset.pattern.permute.xlu0 7
    %269 = vperm.xlu0 %268, %v46
    %v270 = vpop.permute.xlu0 %269
    %v272 = vmul.f32 %v270, %v97
    %273 = vset.pattern.permute.xlu0 15
    %274 = vperm.xlu0 %273, %v58
    %v275 = vpop.permute.xlu0 %274
    %v277 = vmul.f32 %v275, %v106
    %v278 = vadd.f32 %v272, %v277
    %279 = vset.pattern.permute.xlu0 23
    %280 = vperm.xlu0 %279, %v73
    %v281 = vpop.permute.xlu0 %280
    %v283 = vmul.f32 %v281, %v116
    %v284 = vadd.f32 %v278, %v283
    %285 = vset.pattern.permute.xlu0 7
    %286 = vperm.xlu0 %285, %v83
    %v287 = vpop.permute.xlu0 %286
    %v289 = vmul.f32 %v287, %v127
    %v290 = vadd.f32 %v284, %v289
    %v291 = vxor.u32 %v129, 2147483648
    %v292 = vmul.f32 %v291, 1.442695
    %v293 = vpow.pop %v292
    %v294 = vadd.f32 %v293, 1.0
    %v295 = vrcp.pop %v294
    %v296 = vmul.f32 1.0, %v295
    %v297 = vtanh.pop %v129
    %v298 = vmul.f32 %v296, 0.0
    %300 = vrot.lane.b32.xlu0 %v297, 64
    %v301 = vpop.permute.xlu0 %300
    %v303 = vmul.f32 %v296, %v301
    %305 = vrot.lane.b32.xlu0 %v303, 32
    %v306 = vpop.permute.xlu0 %305
    %v308 = vadd.f32 %v298, %v306
    %v309 = vtanh.pop %v308
    %311 = vrot.lane.b32.xlu0 %v309, 64
    %v312 = vpop.permute.xlu0 %311
    %v314 = vmul.f32 %v296, %v312
    %316 = vrot.lane.b32.xlu0 %v314, 32
    %v317 = vpop.permute.xlu0 %316
    %vm318 = vcmask 261120
    %v319 = vsel %vm318, %v317, 0
    %321 = vmatprep.subr.mxu0 0.0
    %322 = vmatpush1.msra.mxu0 %v85
    %323 = vmatprep.subr.mxu0 0.0
    %324 = vmatpush1.msra.mxu0 %v86
    %325 = vmatprep.subr.mxu0 0.0
    %326 = vmatpush1.msra.mxu0 %v87
    %327 = vmatprep.subr.mxu0 0.0
    %328 = vmatpush1.msra.mxu0 %v88
    %329 = vmatprep.subr.mxu0 0.0
    %330 = vmatpush1.msra.mxu0 0.0
    %331 = vmatprep.subr.mxu0 0.0
    %332 = vmatpush1.msra.mxu0 0.0
    %333 = vmatprep.subr.mxu0 0.0
    %334 = vmatpush1.msra.mxu0 0.0
    %335 = vmatprep.subr.mxu0 0.0
    %336 = vmatpush1.msra.mxu0 0.0
    %337 = vmatprep.subr.mxu0 0.0
    %338 = vmatpush1.msra.mxu0 0.0
    %339 = vmatprep.subr.mxu0 0.0
    %340 = vmatpush1.msra.mxu0 0.0
    %341 = vmatprep.subr.mxu0 0.0
    %342 = vmatpush1.msra.mxu0 0.0
    %343 = vmatprep.subr.mxu0 0.0
    %344 = vmatpush1.msra.mxu0 0.0
    %345 = vmatprep.subr.mxu0 0.0
    %346 = vmatpush1.msra.mxu0 0.0
    %347 = vmatprep.subr.mxu0 0.0
    %348 = vmatpush1.msra.mxu0 0.0
    %349 = vmatprep.subr.mxu0 0.0
    %350 = vmatpush1.msra.mxu0 0.0
    %351 = vmatprep.subr.mxu0 0.0
    %352 = vmatpush1.msra.mxu0 0.0
    %353 = vmatprep.subr.mxu0 0.0
    %354 = vmatpush1.msra.mxu0 0.0
    %355 = vmatprep.subr.mxu0 0.0
    %356 = vmatpush1.msra.mxu0 0.0
    %357 = vmatprep.subr.mxu0 0.0
    %358 = vmatpush1.msra.mxu0 0.0
    %359 = vmatprep.subr.mxu0 0.0
    %360 = vmatpush1.msra.mxu0 0.0
    %361 = vmatprep.subr.mxu0 0.0
    %362 = vmatpush1.msra.mxu0 0.0
    %363 = vmatprep.subr.mxu0 0.0
    %364 = vmatpush1.msra.mxu0 0.0
    %365 = vmatprep.subr.mxu0 0.0
    %366 = vmatpush1.msra.mxu0 0.0
    %367 = vmatprep.subr.mxu0 0.0
    %368 = vmatpush1.msra.mxu0 0.0
    %369 = vmatprep.subr.mxu0 0.0
    %370 = vmatpush1.msra.mxu0 0.0
    %371 = vmatprep.subr.mxu0 0.0
    %372 = vmatpush1.msra.mxu0 0.0
    %373 = vmatprep.subr.mxu0 0.0
    %374 = vmatpush1.msra.mxu0 0.0
    %375 = vmatprep.subr.mxu0 0.0
    %376 = vmatpush1.msra.mxu0 0.0
    %377 = vmatprep.subr.mxu0 0.0
    %378 = vmatpush1.msra.mxu0 0.0
    %379 = vmatprep.subr.mxu0 0.0
    %380 = vmatpush1.msra.mxu0 0.0
    %381 = vmatprep.subr.mxu0 0.0
    %382 = vmatpush1.msra.mxu0 0.0
    %383 = vmatprep.subr.mxu0 0.0
    %384 = vmatpush1.msra.mxu0 0.0
    %385 = vmatprep.mubr.f32.mxu0 0.0
    %386 = vmatmul.mubr.f32.gmra.mrb[0].mxu0 %v319
    %v387 = vpop.f32.mrb[0].mxu0
    %v388 = vadd.f32 0.0, %v387
    %v389 = vpop.f32.mrb[0].mxu0
    %390 = vdwg.mxu0
    %v391 = vadd.f32 %v152, %v388
    %v392 = vxor.u32 %v391, 2147483648
    %v393 = vmul.f32 %v392, 1.442695
    %v394 = vpow.pop %v393
    %v395 = vadd.f32 %v394, 1.0
    %v396 = vrcp.pop %v395
    %v397 = vmul.f32 1.0, %v396
    %v398 = vtanh.pop %v391
    %v399 = vmul.f32 %v397, %v308
    %401 = vrot.lane.b32.xlu0 %v398, 64
    %v402 = vpop.permute.xlu0 %401
    %v404 = vmul.f32 %v397, %v402
    %406 = vrot.lane.b32.xlu0 %v404, 32
    %v407 = vpop.permute.xlu0 %406
    %v409 = vadd.f32 %v399, %v407
    %v410 = vtanh.pop %v409
    %412 = vrot.lane.b32.xlu0 %v410, 64
    %v413 = vpop.permute.xlu0 %412
    %v415 = vmul.f32 %v397, %v413
    %417 = vrot.lane.b32.xlu0 %v415, 32
    %v418 = vpop.permute.xlu0 %417
    %v419 = vsel %vm318, %v418, 0
    %421 = vmatprep.subr.mxu0 0.0
    %422 = vmatpush1.msra.mxu0 %v85
    %423 = vmatprep.subr.mxu0 0.0
    %424 = vmatpush1.msra.mxu0 %v86
    %425 = vmatprep.subr.mxu0 0.0
    %426 = vmatpush1.msra.mxu0 %v87
    %427 = vmatprep.subr.mxu0 0.0
    %428 = vmatpush1.msra.mxu0 %v88
    %429 = vmatprep.subr.mxu0 0.0
    %430 = vmatpush1.msra.mxu0 0.0
    %431 = vmatprep.subr.mxu0 0.0
    %432 = vmatpush1.msra.mxu0 0.0
    %433 = vmatprep.subr.mxu0 0.0
    %434 = vmatpush1.msra.mxu0 0.0
    %435 = vmatprep.subr.mxu0 0.0
    %436 = vmatpush1.msra.mxu0 0.0
    %437 = vmatprep.subr.mxu0 0.0
    %438 = vmatpush1.msra.mxu0 0.0
    %439 = vmatprep.subr.mxu0 0.0
    %440 = vmatpush1.msra.mxu0 0.0
    %441 = vmatprep.subr.mxu0 0.0
    %442 = vmatpush1.msra.mxu0 0.0
    %443 = vmatprep.subr.mxu0 0.0
    %444 = vmatpush1.msra.mxu0 0.0
    %445 = vmatprep.subr.mxu0 0.0
    %446 = vmatpush1.msra.mxu0 0.0
    %447 = vmatprep.subr.mxu0 0.0
    %448 = vmatpush1.msra.mxu0 0.0
    %449 = vmatprep.subr.mxu0 0.0
    %450 = vmatpush1.msra.mxu0 0.0
    %451 = vmatprep.subr.mxu0 0.0
    %452 = vmatpush1.msra.mxu0 0.0
    %453 = vmatprep.subr.mxu0 0.0
    %454 = vmatpush1.msra.mxu0 0.0
    %455 = vmatprep.subr.mxu0 0.0
    %456 = vmatpush1.msra.mxu0 0.0
    %457 = vmatprep.subr.mxu0 0.0
    %458 = vmatpush1.msra.mxu0 0.0
    %459 = vmatprep.subr.mxu0 0.0
    %460 = vmatpush1.msra.mxu0 0.0
    %461 = vmatprep.subr.mxu0 0.0
    %462 = vmatpush1.msra.mxu0 0.0
    %463 = vmatprep.subr.mxu0 0.0
    %464 = vmatpush1.msra.mxu0 0.0
    %465 = vmatprep.subr.mxu0 0.0
    %466 = vmatpush1.msra.mxu0 0.0
    %467 = vmatprep.subr.mxu0 0.0
    %468 = vmatpush1.msra.mxu0 0.0
    %469 = vmatprep.subr.mxu0 0.0
    %470 = vmatpush1.msra.mxu0 0.0
    %471 = vmatprep.subr.mxu0 0.0
    %472 = vmatpush1.msra.mxu0 0.0
    %473 = vmatprep.subr.mxu0 0.0
    %474 = vmatpush1.msra.mxu0 0.0
    %475 = vmatprep.subr.mxu0 0.0
    %476 = vmatpush1.msra.mxu0 0.0
    %477 = vmatprep.subr.mxu0 0.0
    %478 = vmatpush1.msra.mxu0 0.0
    %479 = vmatprep.subr.mxu0 0.0
    %480 = vmatpush1.msra.mxu0 0.0
    %481 = vmatprep.subr.mxu0 0.0
    %482 = vmatpush1.msra.mxu0 0.0
    %483 = vmatprep.subr.mxu0 0.0
    %484 = vmatpush1.msra.mxu0 0.0
    %485 = vmatprep.mubr.f32.mxu0 0.0
    %486 = vmatmul.mubr.f32.gmra.mrb[0].mxu0 %v419
    %v487 = vpop.f32.mrb[0].mxu0
    %v488 = vadd.f32 0.0, %v487
    %v489 = vpop.f32.mrb[0].mxu0
    %490 = vdwg.mxu0
    %v491 = vadd.f32 %v175, %v488
    %v492 = vxor.u32 %v491, 2147483648
    %v493 = vmul.f32 %v492, 1.442695
    %v494 = vpow.pop %v493
    %v495 = vadd.f32 %v494, 1.0
    %v496 = vrcp.pop %v495
    %v497 = vmul.f32 1.0, %v496
    %v498 = vtanh.pop %v491
    %v499 = vmul.f32 %v497, %v409
    %501 = vrot.lane.b32.xlu0 %v498, 64
    %v502 = vpop.permute.xlu0 %501
    %v504 = vmul.f32 %v497, %v502
    %506 = vrot.lane.b32.xlu0 %v504, 32
    %v507 = vpop.permute.xlu0 %506
    %v509 = vadd.f32 %v499, %v507
    %v510 = vtanh.pop %v509
    %512 = vrot.lane.b32.xlu0 %v510, 64
    %v513 = vpop.permute.xlu0 %512
    %v515 = vmul.f32 %v497, %v513
    %517 = vrot.lane.b32.xlu0 %v515, 32
    %v518 = vpop.permute.xlu0 %517
    %v519 = vsel %vm318, %v518, 0
    %521 = vmatprep.subr.mxu0 0.0
    %522 = vmatpush1.msra.mxu0 %v85
    %523 = vmatprep.subr.mxu0 0.0
    %524 = vmatpush1.msra.mxu0 %v86
    %525 = vmatprep.subr.mxu0 0.0
    %526 = vmatpush1.msra.mxu0 %v87
    %527 = vmatprep.subr.mxu0 0.0
    %528 = vmatpush1.msra.mxu0 %v88
    %529 = vmatprep.subr.mxu0 0.0
    %530 = vmatpush1.msra.mxu0 0.0
    %531 = vmatprep.subr.mxu0 0.0
    %532 = vmatpush1.msra.mxu0 0.0
    %533 = vmatprep.subr.mxu0 0.0
    %534 = vmatpush1.msra.mxu0 0.0
    %535 = vmatprep.subr.mxu0 0.0
    %536 = vmatpush1.msra.mxu0 0.0
    %537 = vmatprep.subr.mxu0 0.0
    %538 = vmatpush1.msra.mxu0 0.0
    %539 = vmatprep.subr.mxu0 0.0
    %540 = vmatpush1.msra.mxu0 0.0
    %541 = vmatprep.subr.mxu0 0.0
    %542 = vmatpush1.msra.mxu0 0.0
    %543 = vmatprep.subr.mxu0 0.0
    %544 = vmatpush1.msra.mxu0 0.0
    %545 = vmatprep.subr.mxu0 0.0
    %546 = vmatpush1.msra.mxu0 0.0
    %547 = vmatprep.subr.mxu0 0.0
    %548 = vmatpush1.msra.mxu0 0.0
    %549 = vmatprep.subr.mxu0 0.0
    %550 = vmatpush1.msra.mxu0 0.0
    %551 = vmatprep.subr.mxu0 0.0
    %552 = vmatpush1.msra.mxu0 0.0
    %553 = vmatprep.subr.mxu0 0.0
    %554 = vmatpush1.msra.mxu0 0.0
    %555 = vmatprep.subr.mxu0 0.0
    %556 = vmatpush1.msra.mxu0 0.0
    %557 = vmatprep.subr.mxu0 0.0
    %558 = vmatpush1.msra.mxu0 0.0
    %559 = vmatprep.subr.mxu0 0.0
    %560 = vmatpush1.msra.mxu0 0.0
    %561 = vmatprep.subr.mxu0 0.0
    %562 = vmatpush1.msra.mxu0 0.0
    %563 = vmatprep.subr.mxu0 0.0
    %564 = vmatpush1.msra.mxu0 0.0
    %565 = vmatprep.subr.mxu0 0.0
    %566 = vmatpush1.msra.mxu0 0.0
    %567 = vmatprep.subr.mxu0 0.0
    %568 = vmatpush1.msra.mxu0 0.0
    %569 = vmatprep.subr.mxu0 0.0
    %570 = vmatpush1.msra.mxu0 0.0
    %571 = vmatprep.subr.mxu0 0.0
    %572 = vmatpush1.msra.mxu0 0.0
    %573 = vmatprep.subr.mxu0 0.0
    %574 = vmatpush1.msra.mxu0 0.0
    %575 = vmatprep.subr.mxu0 0.0
    %576 = vmatpush1.msra.mxu0 0.0
    %577 = vmatprep.subr.mxu0 0.0
    %578 = vmatpush1.msra.mxu0 0.0
    %579 = vmatprep.subr.mxu0 0.0
    %580 = vmatpush1.msra.mxu0 0.0
    %581 = vmatprep.subr.mxu0 0.0
    %582 = vmatpush1.msra.mxu0 0.0
    %583 = vmatprep.subr.mxu0 0.0
    %584 = vmatpush1.msra.mxu0 0.0
    %585 = vmatprep.mubr.f32.mxu0 0.0
    %586 = vmatmul.mubr.f32.gmra.mrb[0].mxu0 %v519
    %v587 = vpop.f32.mrb[0].mxu0
    %v588 = vadd.f32 0.0, %v587
    %v589 = vpop.f32.mrb[0].mxu0
    %590 = vdwg.mxu0
    %v591 = vadd.f32 %v198, %v588
    %v592 = vxor.u32 %v591, 2147483648
    %v593 = vmul.f32 %v592, 1.442695
    %v594 = vpow.pop %v593
    %v595 = vadd.f32 %v594, 1.0
    %v596 = vrcp.pop %v595
    %v597 = vmul.f32 1.0, %v596
    %v598 = vtanh.pop %v591
    %v599 = vmul.f32 %v597, %v509
    %601 = vrot.lane.b32.xlu0 %v598, 64
    %v602 = vpop.permute.xlu0 %601
    %v604 = vmul.f32 %v597, %v602
    %606 = vrot.lane.b32.xlu0 %v604, 32
    %v607 = vpop.permute.xlu0 %606
    %v609 = vadd.f32 %v599, %v607
    %v610 = vtanh.pop %v609
    %612 = vrot.lane.b32.xlu0 %v610, 64
    %v613 = vpop.permute.xlu0 %612
    %v615 = vmul.f32 %v597, %v613
    %617 = vrot.lane.b32.xlu0 %v615, 32
    %v618 = vpop.permute.xlu0 %617
    %v619 = vsel %vm318, %v618, 0
    %621 = vmatprep.subr.mxu0 0.0
    %622 = vmatpush1.msra.mxu0 %v85
    %623 = vmatprep.subr.mxu0 0.0
    %624 = vmatpush1.msra.mxu0 %v86
    %625 = vmatprep.subr.mxu0 0.0
    %626 = vmatpush1.msra.mxu0 %v87
    %627 = vmatprep.subr.mxu0 0.0
    %628 = vmatpush1.msra.mxu0 %v88
    %629 = vmatprep.subr.mxu0 0.0
    %630 = vmatpush1.msra.mxu0 0.0
    %631 = vmatprep.subr.mxu0 0.0
    %632 = vmatpush1.msra.mxu0 0.0
    %633 = vmatprep.subr.mxu0 0.0
    %634 = vmatpush1.msra.mxu0 0.0
    %635 = vmatprep.subr.mxu0 0.0
    %636 = vmatpush1.msra.mxu0 0.0
    %637 = vmatprep.subr.mxu0 0.0
    %638 = vmatpush1.msra.mxu0 0.0
    %639 = vmatprep.subr.mxu0 0.0
    %640 = vmatpush1.msra.mxu0 0.0
    %641 = vmatprep.subr.mxu0 0.0
    %642 = vmatpush1.msra.mxu0 0.0
    %643 = vmatprep.subr.mxu0 0.0
    %644 = vmatpush1.msra.mxu0 0.0
    %645 = vmatprep.subr.mxu0 0.0
    %646 = vmatpush1.msra.mxu0 0.0
    %647 = vmatprep.subr.mxu0 0.0
    %648 = vmatpush1.msra.mxu0 0.0
    %649 = vmatprep.subr.mxu0 0.0
    %650 = vmatpush1.msra.mxu0 0.0
    %651 = vmatprep.subr.mxu0 0.0
    %652 = vmatpush1.msra.mxu0 0.0
    %653 = vmatprep.subr.mxu0 0.0
    %654 = vmatpush1.msra.mxu0 0.0
    %655 = vmatprep.subr.mxu0 0.0
    %656 = vmatpush1.msra.mxu0 0.0
    %657 = vmatprep.subr.mxu0 0.0
    %658 = vmatpush1.msra.mxu0 0.0
    %659 = vmatprep.subr.mxu0 0.0
    %660 = vmatpush1.msra.mxu0 0.0
    %661 = vmatprep.subr.mxu0 0.0
    %662 = vmatpush1.msra.mxu0 0.0
    %663 = vmatprep.subr.mxu0 0.0
    %664 = vmatpush1.msra.mxu0 0.0
    %665 = vmatprep.subr.mxu0 0.0
    %666 = vmatpush1.msra.mxu0 0.0
    %667 = vmatprep.subr.mxu0 0.0
    %668 = vmatpush1.msra.mxu0 0.0
    %669 = vmatprep.subr.mxu0 0.0
    %670 = vmatpush1.msra.mxu0 0.0
    %671 = vmatprep.subr.mxu0 0.0
    %672 = vmatpush1.msra.mxu0 0.0
    %673 = vmatprep.subr.mxu0 0.0
    %674 = vmatpush1.msra.mxu0 0.0
    %675 = vmatprep.subr.mxu0 0.0
    %676 = vmatpush1.msra.mxu0 0.0
    %677 = vmatprep.subr.mxu0 0.0
    %678 = vmatpush1.msra.mxu0 0.0
    %679 = vmatprep.subr.mxu0 0.0
    %680 = vmatpush1.msra.mxu0 0.0
    %681 = vmatprep.subr.mxu0 0.0
    %682 = vmatpush1.msra.mxu0 0.0
    %683 = vmatprep.subr.mxu0 0.0
    %684 = vmatpush1.msra.mxu0 0.0
    %685 = vmatprep.mubr.f32.mxu0 0.0
    %686 = vmatmul.mubr.f32.gmra.mrb[0].mxu0 %v619
    %v687 = vpop.f32.mrb[0].mxu0
    %v688 = vadd.f32 0.0, %v687
    %v689 = vpop.f32.mrb[0].mxu0
    %690 = vdwg.mxu0
    %v691 = vadd.f32 %v221, %v688
    %v692 = vxor.u32 %v691, 2147483648
    %v693 = vmul.f32 %v692, 1.442695
    %v694 = vpow.pop %v693
    %v695 = vadd.f32 %v694, 1.0
    %v696 = vrcp.pop %v695
    %v697 = vmul.f32 1.0, %v696
    %v698 = vtanh.pop %v691
    %v699 = vmul.f32 %v697, %v609
    %701 = vrot.lane.b32.xlu0 %v698, 64
    %v702 = vpop.permute.xlu0 %701
    %v704 = vmul.f32 %v697, %v702
    %706 = vrot.lane.b32.xlu0 %v704, 32
    %v707 = vpop.permute.xlu0 %706
    %v709 = vadd.f32 %v699, %v707
    %v710 = vtanh.pop %v709
    %712 = vrot.lane.b32.xlu0 %v710, 64
    %v713 = vpop.permute.xlu0 %712
    %v715 = vmul.f32 %v697, %v713
    %717 = vrot.lane.b32.xlu0 %v715, 32
    %v718 = vpop.permute.xlu0 %717
    %v719 = vsel %vm318, %v718, 0
    %721 = vmatprep.subr.mxu0 0.0
    %722 = vmatpush1.msra.mxu0 %v85
    %723 = vmatprep.subr.mxu0 0.0
    %724 = vmatpush1.msra.mxu0 %v86
    %725 = vmatprep.subr.mxu0 0.0
    %726 = vmatpush1.msra.mxu0 %v87
    %727 = vmatprep.subr.mxu0 0.0
    %728 = vmatpush1.msra.mxu0 %v88
    %729 = vmatprep.subr.mxu0 0.0
    %730 = vmatpush1.msra.mxu0 0.0
    %731 = vmatprep.subr.mxu0 0.0
    %732 = vmatpush1.msra.mxu0 0.0
    %733 = vmatprep.subr.mxu0 0.0
    %734 = vmatpush1.msra.mxu0 0.0
    %735 = vmatprep.subr.mxu0 0.0
    %736 = vmatpush1.msra.mxu0 0.0
    %737 = vmatprep.subr.mxu0 0.0
    %738 = vmatpush1.msra.mxu0 0.0
    %739 = vmatprep.subr.mxu0 0.0
    %740 = vmatpush1.msra.mxu0 0.0
    %741 = vmatprep.subr.mxu0 0.0
    %742 = vmatpush1.msra.mxu0 0.0
    %743 = vmatprep.subr.mxu0 0.0
    %744 = vmatpush1.msra.mxu0 0.0
    %745 = vmatprep.subr.mxu0 0.0
    %746 = vmatpush1.msra.mxu0 0.0
    %747 = vmatprep.subr.mxu0 0.0
    %748 = vmatpush1.msra.mxu0 0.0
    %749 = vmatprep.subr.mxu0 0.0
    %750 = vmatpush1.msra.mxu0 0.0
    %751 = vmatprep.subr.mxu0 0.0
    %752 = vmatpush1.msra.mxu0 0.0
    %753 = vmatprep.subr.mxu0 0.0
    %754 = vmatpush1.msra.mxu0 0.0
    %755 = vmatprep.subr.mxu0 0.0
    %756 = vmatpush1.msra.mxu0 0.0
    %757 = vmatprep.subr.mxu0 0.0
    %758 = vmatpush1.msra.mxu0 0.0
    %759 = vmatprep.subr.mxu0 0.0
    %760 = vmatpush1.msra.mxu0 0.0
    %761 = vmatprep.subr.mxu0 0.0
    %762 = vmatpush1.msra.mxu0 0.0
    %763 = vmatprep.subr.mxu0 0.0
    %764 = vmatpush1.msra.mxu0 0.0
    %765 = vmatprep.subr.mxu0 0.0
    %766 = vmatpush1.msra.mxu0 0.0
    %767 = vmatprep.subr.mxu0 0.0
    %768 = vmatpush1.msra.mxu0 0.0
    %769 = vmatprep.subr.mxu0 0.0
    %770 = vmatpush1.msra.mxu0 0.0
    %771 = vmatprep.subr.mxu0 0.0
    %772 = vmatpush1.msra.mxu0 0.0
    %773 = vmatprep.subr.mxu0 0.0
    %774 = vmatpush1.msra.mxu0 0.0
    %775 = vmatprep.subr.mxu0 0.0
    %776 = vmatpush1.msra.mxu0 0.0
    %777 = vmatprep.subr.mxu0 0.0
    %778 = vmatpush1.msra.mxu0 0.0
    %779 = vmatprep.subr.mxu0 0.0
    %780 = vmatpush1.msra.mxu0 0.0
    %781 = vmatprep.subr.mxu0 0.0
    %782 = vmatpush1.msra.mxu0 0.0
    %783 = vmatprep.subr.mxu0 0.0
    %784 = vmatpush1.msra.mxu0 0.0
    %785 = vmatprep.mubr.f32.mxu0 0.0
    %786 = vmatmul.mubr.f32.gmra.mrb[0].mxu0 %v719
    %v787 = vpop.f32.mrb[0].mxu0
    %v788 = vadd.f32 0.0, %v787
    %v789 = vpop.f32.mrb[0].mxu0
    %790 = vdwg.mxu0
    %v791 = vadd.f32 %v244, %v788
    %v792 = vxor.u32 %v791, 2147483648
    %v793 = vmul.f32 %v792, 1.442695
    %v794 = vpow.pop %v793
    %v795 = vadd.f32 %v794, 1.0
    %v796 = vrcp.pop %v795
    %v797 = vmul.f32 1.0, %v796
    %v798 = vtanh.pop %v791
    %v799 = vmul.f32 %v797, %v709
    %801 = vrot.lane.b32.xlu0 %v798, 64
    %v802 = vpop.permute.xlu0 %801
    %v804 = vmul.f32 %v797, %v802
    %806 = vrot.lane.b32.xlu0 %v804, 32
    %v807 = vpop.permute.xlu0 %806
    %v809 = vadd.f32 %v799, %v807
    %v810 = vtanh.pop %v809
    %812 = vrot.lane.b32.xlu0 %v810, 64
    %v813 = vpop.permute.xlu0 %812
    %v815 = vmul.f32 %v797, %v813
    %817 = vrot.lane.b32.xlu0 %v815, 32
    %v818 = vpop.permute.xlu0 %817
    %v819 = vsel %vm318, %v818, 0
    %821 = vmatprep.subr.mxu0 0.0
    %822 = vmatpush1.msra.mxu0 %v85
    %823 = vmatprep.subr.mxu0 0.0
    %824 = vmatpush1.msra.mxu0 %v86
    %825 = vmatprep.subr.mxu0 0.0
    %826 = vmatpush1.msra.mxu0 %v87
    %827 = vmatprep.subr.mxu0 0.0
    %828 = vmatpush1.msra.mxu0 %v88
    %829 = vmatprep.subr.mxu0 0.0
    %830 = vmatpush1.msra.mxu0 0.0
    %831 = vmatprep.subr.mxu0 0.0
    %832 = vmatpush1.msra.mxu0 0.0
    %833 = vmatprep.subr.mxu0 0.0
    %834 = vmatpush1.msra.mxu0 0.0
    %835 = vmatprep.subr.mxu0 0.0
    %836 = vmatpush1.msra.mxu0 0.0
    %837 = vmatprep.subr.mxu0 0.0
    %838 = vmatpush1.msra.mxu0 0.0
    %839 = vmatprep.subr.mxu0 0.0
    %840 = vmatpush1.msra.mxu0 0.0
    %841 = vmatprep.subr.mxu0 0.0
    %842 = vmatpush1.msra.mxu0 0.0
    %843 = vmatprep.subr.mxu0 0.0
    %844 = vmatpush1.msra.mxu0 0.0
    %845 = vmatprep.subr.mxu0 0.0
    %846 = vmatpush1.msra.mxu0 0.0
    %847 = vmatprep.subr.mxu0 0.0
    %848 = vmatpush1.msra.mxu0 0.0
    %849 = vmatprep.subr.mxu0 0.0
    %850 = vmatpush1.msra.mxu0 0.0
    %851 = vmatprep.subr.mxu0 0.0
    %852 = vmatpush1.msra.mxu0 0.0
    %853 = vmatprep.subr.mxu0 0.0
    %854 = vmatpush1.msra.mxu0 0.0
    %855 = vmatprep.subr.mxu0 0.0
    %856 = vmatpush1.msra.mxu0 0.0
    %857 = vmatprep.subr.mxu0 0.0
    %858 = vmatpush1.msra.mxu0 0.0
    %859 = vmatprep.subr.mxu0 0.0
    %860 = vmatpush1.msra.mxu0 0.0
    %861 = vmatprep.subr.mxu0 0.0
    %862 = vmatpush1.msra.mxu0 0.0
    %863 = vmatprep.subr.mxu0 0.0
    %864 = vmatpush1.msra.mxu0 0.0
    %865 = vmatprep.subr.mxu0 0.0
    %866 = vmatpush1.msra.mxu0 0.0
    %867 = vmatprep.subr.mxu0 0.0
    %868 = vmatpush1.msra.mxu0 0.0
    %869 = vmatprep.subr.mxu0 0.0
    %870 = vmatpush1.msra.mxu0 0.0
    %871 = vmatprep.subr.mxu0 0.0
    %872 = vmatpush1.msra.mxu0 0.0
    %873 = vmatprep.subr.mxu0 0.0
    %874 = vmatpush1.msra.mxu0 0.0
    %875 = vmatprep.subr.mxu0 0.0
    %876 = vmatpush1.msra.mxu0 0.0
    %877 = vmatprep.subr.mxu0 0.0
    %878 = vmatpush1.msra.mxu0 0.0
    %879 = vmatprep.subr.mxu0 0.0
    %880 = vmatpush1.msra.mxu0 0.0
    %881 = vmatprep.subr.mxu0 0.0
    %882 = vmatpush1.msra.mxu0 0.0
    %883 = vmatprep.subr.mxu0 0.0
    %884 = vmatpush1.msra.mxu0 0.0
    %885 = vmatprep.mubr.f32.mxu0 0.0
    %886 = vmatmul.mubr.f32.gmra.mrb[0].mxu0 %v819
    %v887 = vpop.f32.mrb[0].mxu0
    %v888 = vadd.f32 0.0, %v887
    %v889 = vpop.f32.mrb[0].mxu0
    %890 = vdwg.mxu0
    %v891 = vadd.f32 %v267, %v888
    %v892 = vxor.u32 %v891, 2147483648
    %v893 = vmul.f32 %v892, 1.442695
    %v894 = vpow.pop %v893
    %v895 = vadd.f32 %v894, 1.0
    %v896 = vrcp.pop %v895
    %v897 = vmul.f32 1.0, %v896
    %v898 = vtanh.pop %v891
    %v899 = vmul.f32 %v897, %v809
    %901 = vrot.lane.b32.xlu0 %v898, 64
    %v902 = vpop.permute.xlu0 %901
    %v904 = vmul.f32 %v897, %v902
    %906 = vrot.lane.b32.xlu0 %v904, 32
    %v907 = vpop.permute.xlu0 %906
    %v909 = vadd.f32 %v899, %v907
    %v910 = vtanh.pop %v909
    %912 = vrot.lane.b32.xlu0 %v910, 64
    %v913 = vpop.permute.xlu0 %912
    %v915 = vmul.f32 %v897, %v913
    %917 = vrot.lane.b32.xlu0 %v915, 32
    %v918 = vpop.permute.xlu0 %917
    %v919 = vsel %vm318, %v918, 0
    %921 = vmatprep.subr.mxu0 0.0
    %922 = vmatpush1.msra.mxu0 %v85
    %923 = vmatprep.subr.mxu0 0.0
    %924 = vmatpush1.msra.mxu0 %v86
    %925 = vmatprep.subr.mxu0 0.0
    %926 = vmatpush1.msra.mxu0 %v87
    %927 = vmatprep.subr.mxu0 0.0
    %928 = vmatpush1.msra.mxu0 %v88
    %929 = vmatprep.subr.mxu0 0.0
    %930 = vmatpush1.msra.mxu0 0.0
    %931 = vmatprep.subr.mxu0 0.0
    %932 = vmatpush1.msra.mxu0 0.0
    %933 = vmatprep.subr.mxu0 0.0
    %934 = vmatpush1.msra.mxu0 0.0
    %935 = vmatprep.subr.mxu0 0.0
    %936 = vmatpush1.msra.mxu0 0.0
    %937 = vmatprep.subr.mxu0 0.0
    %938 = vmatpush1.msra.mxu0 0.0
    %939 = vmatprep.subr.mxu0 0.0
    %940 = vmatpush1.msra.mxu0 0.0
    %941 = vmatprep.subr.mxu0 0.0
    %942 = vmatpush1.msra.mxu0 0.0
    %943 = vmatprep.subr.mxu0 0.0
    %944 = vmatpush1.msra.mxu0 0.0
    %945 = vmatprep.subr.mxu0 0.0
    %946 = vmatpush1.msra.mxu0 0.0
    %947 = vmatprep.subr.mxu0 0.0
    %948 = vmatpush1.msra.mxu0 0.0
    %949 = vmatprep.subr.mxu0 0.0
    %950 = vmatpush1.msra.mxu0 0.0
    %951 = vmatprep.subr.mxu0 0.0
    %952 = vmatpush1.msra.mxu0 0.0
    %953 = vmatprep.subr.mxu0 0.0
    %954 = vmatpush1.msra.mxu0 0.0
    %955 = vmatprep.subr.mxu0 0.0
    %956 = vmatpush1.msra.mxu0 0.0
    %957 = vmatprep.subr.mxu0 0.0
    %958 = vmatpush1.msra.mxu0 0.0
    %959 = vmatprep.subr.mxu0 0.0
    %960 = vmatpush1.msra.mxu0 0.0
    %961 = vmatprep.subr.mxu0 0.0
    %962 = vmatpush1.msra.mxu0 0.0
    %963 = vmatprep.subr.mxu0 0.0
    %964 = vmatpush1.msra.mxu0 0.0
    %965 = vmatprep.subr.mxu0 0.0
    %966 = vmatpush1.msra.mxu0 0.0
    %967 = vmatprep.subr.mxu0 0.0
    %968 = vmatpush1.msra.mxu0 0.0
    %969 = vmatprep.subr.mxu0 0.0
    %970 = vmatpush1.msra.mxu0 0.0
    %971 = vmatprep.subr.mxu0 0.0
    %972 = vmatpush1.msra.mxu0 0.0
    %973 = vmatprep.subr.mxu0 0.0
    %974 = vmatpush1.msra.mxu0 0.0
    %975 = vmatprep.subr.mxu0 0.0
    %976 = vmatpush1.msra.mxu0 0.0
    %977 = vmatprep.subr.mxu0 0.0
    %978 = vmatpush1.msra.mxu0 0.0
    %979 = vmatprep.subr.mxu0 0.0
    %980 = vmatpush1.msra.mxu0 0.0
    %981 = vmatprep.subr.mxu0 0.0
    %982 = vmatpush1.msra.mxu0 0.0
    %983 = vmatprep.subr.mxu0 0.0
    %984 = vmatpush1.msra.mxu0 0.0
    %985 = vmatprep.mubr.f32.mxu0 0.0
    %986 = vmatmul.mubr.f32.gmra.mrb[0].mxu0 %v919
    %v987 = vpop.f32.mrb[0].mxu0
    %v988 = vadd.f32 0.0, %v987
    %v989 = vpop.f32.mrb[0].mxu0
    %990 = vdwg.mxu0
    %v991 = vadd.f32 %v290, %v988
    %v992 = vxor.u32 %v991, 2147483648
    %v993 = vmul.f32 %v992, 1.442695
    %v994 = vpow.pop %v993
    %v995 = vadd.f32 %v994, 1.0
    %v996 = vrcp.pop %v995
    %v997 = vmul.f32 1.0, %v996
    %v998 = vtanh.pop %v991
    %v999 = vmul.f32 %v997, %v909
    %1001 = vrot.lane.b32.xlu0 %v998, 64
    %v1002 = vpop.permute.xlu0 %1001
    %v1004 = vmul.f32 %v997, %v1002
    %1006 = vrot.lane.b32.xlu0 %v1004, 32
    %v1007 = vpop.permute.xlu0 %1006
    %v1009 = vadd.f32 %v999, %v1007
    %v1010 = vtanh.pop %v1009
    %1012 = vrot.lane.b32.xlu0 %v1010, 64
    %v1013 = vpop.permute.xlu0 %1012
    %v1015 = vmul.f32 %v997, %v1013
    %v1016 = vld [vmem:[#allocation3] sm:$0x1]
    %v1018 = vlaneseq
    %v1019 = vshrl.u32 %v1018, 7
    %v1020 = vsub.s32 0, %v1019
    %v1021 = vrot.slane %v1016, %v1020
    %1022 = vrot.lane.b32.xlu0 %v1021, 96
    %v1023 = vpop.permute.xlu0 %1022
    %v1025 = vmul.f32 %v1015, %v1023
    %1027 = vrot.lane.b32.xlu0 %v1025, 32
    %v1028 = vpop.permute.xlu0 %1027
    %v1030 = vsel %vm318, %v1028, 0.0
    %1031 = vadd.xlane.f32.xlu0 %v1030
    %v1032 = vpop.xlane.xlu0 %1031
    %v1033 = vld [vmem:[#allocation2] sm:$0x1]
    %v1035 = vlaneseq
    %v1036 = vshrl.u32 %v1035, 7
    %v1037 = vsub.s32 0, %v1036
    %v1038 = vrot.slane %v1033, %v1037
    %v1040 = vadd.f32 %v1032, %v1038
    %vm1041 = vcmask 7168
    %1042 = vst.msk [vmem:[%s5] sm:$0xff] %vm1041, %v1040
    // Predicated region
    $region26: #{simple_lstm_forward.1} parent=1 // pred_check
      _
    $region27: #{simple_lstm_forward.1} parent=1 // pred_check_branch
      %1044 = sbr.rel (0) target = $region29
    $region28: #{simple_lstm_forward.1} parent=1 // pred_region
      _
    $region29: #{simple_lstm_forward.1} parent=1 // pred_fallthru
      _
    // Predicated region
    $region30: #{simple_lstm_forward.1} parent=1 // pred_check
      _
    $region31: #{simple_lstm_forward.1} parent=1 // pred_check_branch
      %1046 = sbr.rel (0) target = $region33
    $region32: #{simple_lstm_forward.1} parent=1 // pred_region
      _
    $region33: #{simple_lstm_forward.1} parent=1 // pred_fallthru
      _
    %1047 = vsyncpa [#allocation4], 1

</llo_original>
